<compile_context>
chip_gen: v6e
topology: v6e:2x2x1
jax: 0.10.0
libtpu: 0.0.40
codegen_flags: <defaults>
</compile_context>

<pallas_src>
import functools

import jax
import jax.numpy as jnp
from jax.experimental import pallas as pl
from jax.experimental.pallas import tpu as pltpu


def _fused_conv_kernel(x_ref, s_ref, l_ref, b_ref, o_ref, *, K):
    """One grid step == one sample n.

    x_ref: (C*H, W)           input slab for sample n, native NCHW order (free view)
    s_ref: (K, W, Wo)         one-hot lane-selection matrices (resident)
    l_ref: (K, Cout*Ho, C*H)  conv weights folded with the (ki, ho) structure (resident)
    b_ref: (Cout*Ho, 1)       bias broadcast over output rows, f32 (resident)
    o_ref: (Cout*Ho, Wo)      output slab for sample n, native NCHW order (free view)
    """
    xv = x_ref[...]
    if xv.dtype != l_ref.dtype:
        # In-kernel cast (VPU): no extra HBM pass, enables bf16 MXU on v5e/v6e/v7x.
        xv = xv.astype(l_ref.dtype)
    acc = jnp.zeros(o_ref.shape, jnp.float32)
    for kj in range(K):  # K == stride (default 2): fully unrolled static loop
        # Lane de-interleave x[.., wo*K + kj] -> wo via a one-hot matmul on the MXU.
        # Exact: each output element is a single 1.0 * x product, f32 accumulate.
        y = jnp.dot(xv, s_ref[kj], preferred_element_type=jnp.float32)
        y = y.astype(l_ref.dtype)
        # (c, ki) contraction + scatter into output rows (co, ho); f32 accumulate.
        acc = acc + jnp.dot(l_ref[kj], y, preferred_element_type=jnp.float32)
    o_ref[...] = (acc + b_ref[...]).astype(o_ref.dtype)


def _selection_mats(W, K, dtype):
    """S[kj, w, wo] = 1 iff w == wo*K + kj  (one-hot lane de-interleave)."""
    Wo = W // K
    w_idx = jnp.arange(W)[:, None]
    wo_idx = jnp.arange(Wo)[None, :]
    return jnp.stack(
        [(w_idx == wo_idx * K + kj).astype(dtype) for kj in range(K)])  # (K, W, Wo)


def _folded_weight_mats(weight, H, dtype):
    """L[kj, co*Ho + ho, c*H + h] = weight[co, c, h - ho*K, kj] if 0 <= h - ho*K < K else 0.

    Folds the (c, ki) contraction AND the h -> ho selection into one matmul operand.
    Tiny (Cout*C*H^2/K elements); built once per call from the conv weights.
    """
    Cout, C, K, _ = weight.shape
    Ho = H // K
    ho = jnp.arange(Ho)
    h = jnp.arange(H)
    rel = h[None, :] - ho[:, None] * K            # (Ho, H)
    valid = (rel >= 0) & (rel < K)
    rel_c = jnp.clip(rel, 0, K - 1)
    wf = weight.astype(jnp.float32)
    mats = []
    for kj in range(K):
        wk = wf[:, :, :, kj]                                       # (Cout, C, K)
        lf = jnp.where(valid[None, None], wk[:, :, rel_c], 0.0)    # (Cout, C, Ho, H)
        lf = jnp.transpose(lf, (0, 2, 1, 3)).reshape(Cout * Ho, C * H)
        mats.append(lf)
    return jnp.stack(mats).astype(dtype)                           # (K, Cout*Ho, C*H)


def conv_then_upsample_forward(x, weight, bias, stride, *, compute_dtype=None):
    """Forward pass of ConvThenUpsample (default config: plain stride-K conv).

    Args:
      x:             [N, C, H, W]  (NCHW, like PyTorch; N = B * 12 HEALPix faces)
      weight:        [Cout, Cin, K, K]  (PyTorch Conv2d layout), K == stride
      bias:          [Cout]
      stride:        int; kernel_size == stride, padding == 0
      compute_dtype: optional MXU input dtype (e.g. jnp.bfloat16 — supported on
                     v5e/v6e/v7x).  Cast happens in-kernel; accumulation, bias add
                     and the output dtype stay float32 / x.dtype.

    Returns:
      [N, Cout, H // stride, W // stride]
    """
    N, C, H, W = x.shape
    Cout, Cin, K, K2 = weight.shape
    assert Cin == C and K == stride and K2 == stride, "weight must be (Cout, Cin, stride, stride)"
    assert H % K == 0 and W % K == 0, "H and W must be divisible by stride (padding=0)"
    Ho, Wo = H // K, W // K

    out_dtype = x.dtype
    mm_dtype = jnp.dtype(compute_dtype) if compute_dtype is not None else jnp.dtype(x.dtype)
    x_bytes = jnp.dtype(x.dtype).itemsize
    mm_bytes = mm_dtype.itemsize
    out_bytes = jnp.dtype(out_dtype).itemsize

    # ---- tiny constant operands derived from weights/bias (cached by jit in a model)
    s_mats = _selection_mats(W, K, mm_dtype)            # (K, W, Wo)
    l_mats = _folded_weight_mats(weight, H, mm_dtype)   # (K, Cout*Ho, C*H)
    b_rows = jnp.repeat(bias.astype(jnp.float32), Ho).reshape(Cout * Ho, 1)

    # ---- FREE row-major views: no transpose / pad / slice of the activation ----
    x3 = x.reshape(N, C * H, W)

    # ---- per-TensorCore VMEM planning (v7x-safe) and footprint-tied vmem limit ----
    blk_in = C * H * W * x_bytes
    blk_out = Cout * Ho * Wo * out_bytes
    blk_par = (K * W * Wo + K * Cout * Ho * C * H) * mm_bytes + Cout * Ho * 4
    footprint = 2 * (blk_in + blk_out + blk_par)        # conservative: everything x2-buffered

    try:
        vmem_cap = int(pltpu.get_tpu_info().vmem_capacity_bytes)
    except Exception:
        vmem_cap = 64 * 1024 * 1024
    vmem_cap = min(vmem_cap, 64 * 1024 * 1024)          # never assume more than per-TC VMEM
    if footprint > vmem_cap // 2:
        # TODO(synk): tile over H / W for very large per-sample slabs.
        raise NotImplementedError(
            f"per-sample working set {footprint} B exceeds the conservative per-core "
            f"VMEM budget {vmem_cap // 2} B; H/W tiling not implemented")
    vmem_limit = int(min(max(3 * footprint + (4 << 20), 16 << 20), vmem_cap * 3 // 4))

    flops = 2 * N * K * Wo * (C * H * W + Cout * Ho * C * H)
    bytes_accessed = (N * blk_in + N * blk_out
                      + (K * W * Wo + K * Cout * Ho * C * H) * mm_bytes + Cout * Ho * 4)
    cost = pl.CostEstimate(flops=flops, bytes_accessed=bytes_accessed, transcendentals=0)

    out3 = pl.pallas_call(
        functools.partial(_fused_conv_kernel, K=K),
        out_shape=jax.ShapeDtypeStruct((N, Cout * Ho, Wo), out_dtype),
        grid=(N,),
        in_specs=[
            pl.BlockSpec((None, C * H, W), lambda n: (n, 0, 0)),       # activation slab
            pl.BlockSpec((K, W, Wo), lambda n: (0, 0, 0)),             # selection mats (resident)
            pl.BlockSpec((K, Cout * Ho, C * H), lambda n: (0, 0, 0)),  # folded weights (resident)
            pl.BlockSpec((Cout * Ho, 1), lambda n: (0, 0)),            # bias rows, f32 (resident)
        ],
        out_specs=pl.BlockSpec((None, Cout * Ho, Wo), lambda n: (n, 0, 0)),
        compiler_params=pltpu.CompilerParams(
            dimension_semantics=("parallel",),
            vmem_limit_bytes=vmem_limit,
        ),
        cost_estimate=cost,
    )(x3, s_mats, l_mats, b_rows)

    return out3.reshape(N, Cout, Ho, Wo)                # free view back to NCHW


if __name__ == "__main__":
    key = jax.random.PRNGKey(0)

    def run_case(N, Cin, Cout, H, W, stride, compute_dtype, tol):
        kx, kw, kb = jax.random.split(jax.random.fold_in(key, 131 * N + 7 * Cin + Cout), 3)
        x = jax.random.normal(kx, (N, Cin, H, W), dtype=jnp.float32)
        fan_in = Cin * stride * stride
        weight = jax.random.normal(
            kw, (Cout, Cin, stride, stride), dtype=jnp.float32) / jnp.sqrt(fan_in)
        bias = jax.random.normal(kb, (Cout,), dtype=jnp.float32) * 0.1

        out = conv_then_upsample_forward(x, weight, bias, stride,
                                         compute_dtype=compute_dtype)
        out = jax.block_until_ready(out)

        ref = jax.lax.conv_general_dilated(
            x, weight, window_strides=(stride, stride), padding="VALID",
            dimension_numbers=("NCHW", "OIHW", "NCHW"),
            precision=jax.lax.Precision.HIGHEST,
        ) + bias.reshape(1, Cout, 1, 1)
        assert out.shape == (N, Cout, H // stride, W // stride), out.shape
        # Tolerances are loose enough to be robust to MXU pass-precision differences;
        # structural/indexing bugs produce O(1) errors and would still be caught.
        assert jnp.allclose(out, ref, atol=tol, rtol=tol), (N, Cin, Cout, compute_dtype)

    # Module defaults: in_channels=3, out_channels=1, stride=2.
    run_case(2, 3, 1, 16, 16, 2, None, 2e-2)
    # Larger channel counts + odd batch (exercises multi-step grid, Cout > 1).
    run_case(3, 4, 2, 16, 16, 2, None, 2e-2)
    # bf16 MXU streaming path (supported on v5e/v6e/v7x); f32 accumulation.
    run_case(2, 3, 1, 16, 16, 2, jnp.bfloat16, 6e-2)

    print("KERNEL_OK")
</pallas_src>

<mosaic_0001>
module attributes {stable_mosaic.version = 11 : i64} {
  func.func @_fused_conv_kernel(%arg0: i32, %arg1: memref<1x48x16xf32, #tpu.memory_space<vmem>>, %arg2: memref<2x16x8xf32, #tpu.memory_space<vmem>>, %arg3: memref<2x8x48xf32, #tpu.memory_space<vmem>>, %arg4: memref<8x1xf32, #tpu.memory_space<vmem>>, %arg5: memref<1x8x8xf32, #tpu.memory_space<vmem>>) attributes {dimension_semantics = [#tpu.dimension_semantics<parallel>], iteration_bounds = array<i64: 2>, scalar_prefetch = 0 : i64, scratch_operands = 0 : i64, tpu.core_type = #tpu.core_type<tc>, window_params = [{transform_indices = @transform_0, window_bounds = array<i64: 1, 48, 16>}, {pipeline_mode = #tpu.pipeline_mode<synchronous>, transform_indices = @transform_1, window_bounds = array<i64: 2, 16, 8>}, {pipeline_mode = #tpu.pipeline_mode<synchronous>, transform_indices = @transform_2, window_bounds = array<i64: 2, 8, 48>}, {pipeline_mode = #tpu.pipeline_mode<synchronous>, transform_indices = @transform_3, window_bounds = array<i64: 8, 1>}, {transform_indices = @transform_4, window_bounds = array<i64: 1, 8, 8>}]} {
    %c0 = arith.constant 0 : index
    %c0_0 = arith.constant 0 : index
    %c0_1 = arith.constant 0 : index
    %0 = vector.load %arg1[%c0, %c0_0, %c0_1] : memref<1x48x16xf32, #tpu.memory_space<vmem>>, vector<1x48x16xf32>
    %1 = vector.shape_cast %0 : vector<1x48x16xf32> to vector<48x16xf32>
    %cst = arith.constant 0.000000e+00 : f32
    %2 = vector.broadcast %cst : f32 to vector<8x8xf32>
    %c0_2 = arith.constant 0 : index
    %c0_3 = arith.constant 0 : index
    %c0_4 = arith.constant 0 : index
    %3 = vector.load %arg2[%c0_2, %c0_3, %c0_4] : memref<2x16x8xf32, #tpu.memory_space<vmem>>, vector<1x16x8xf32>
    %4 = vector.shape_cast %3 : vector<1x16x8xf32> to vector<16x8xf32>
    %cst_5 = arith.constant dense<0.000000e+00> : vector<48x8xf32>
    %5 = tpu.matmul %1, %4, %cst_5 {dimension_numbers = #tpu.dot_dimension_numbers<[1], [0], [0], [1], [0, 0, 1, 1], [], []>} : vector<48x16xf32>, vector<16x8xf32>, vector<48x8xf32> -> vector<48x8xf32>
    %c0_6 = arith.constant 0 : index
    %c0_7 = arith.constant 0 : index
    %c0_8 = arith.constant 0 : index
    %6 = vector.load %arg3[%c0_6, %c0_7, %c0_8] : memref<2x8x48xf32, #tpu.memory_space<vmem>>, vector<1x8x48xf32>
    %7 = vector.shape_cast %6 : vector<1x8x48xf32> to vector<8x48xf32>
    %cst_9 = arith.constant dense<0.000000e+00> : vector<8x8xf32>
    %8 = tpu.matmul %7, %5, %cst_9 {dimension_numbers = #tpu.dot_dimension_numbers<[1], [0], [0], [1], [0, 0, 1, 1], [], []>} : vector<8x48xf32>, vector<48x8xf32>, vector<8x8xf32> -> vector<8x8xf32>
    %9 = arith.addf %2, %8 : vector<8x8xf32>
    %c1 = arith.constant 1 : index
    %c0_10 = arith.constant 0 : index
    %c0_11 = arith.constant 0 : index
    %10 = vector.load %arg2[%c1, %c0_10, %c0_11] : memref<2x16x8xf32, #tpu.memory_space<vmem>>, vector<1x16x8xf32>
    %11 = vector.shape_cast %10 : vector<1x16x8xf32> to vector<16x8xf32>
    %cst_12 = arith.constant dense<0.000000e+00> : vector<48x8xf32>
    %12 = tpu.matmul %1, %11, %cst_12 {dimension_numbers = #tpu.dot_dimension_numbers<[1], [0], [0], [1], [0, 0, 1, 1], [], []>} : vector<48x16xf32>, vector<16x8xf32>, vector<48x8xf32> -> vector<48x8xf32>
    %c1_13 = arith.constant 1 : index
    %c0_14 = arith.constant 0 : index
    %c0_15 = arith.constant 0 : index
    %13 = vector.load %arg3[%c1_13, %c0_14, %c0_15] : memref<2x8x48xf32, #tpu.memory_space<vmem>>, vector<1x8x48xf32>
    %14 = vector.shape_cast %13 : vector<1x8x48xf32> to vector<8x48xf32>
    %cst_16 = arith.constant dense<0.000000e+00> : vector<8x8xf32>
    %15 = tpu.matmul %14, %12, %cst_16 {dimension_numbers = #tpu.dot_dimension_numbers<[1], [0], [0], [1], [0, 0, 1, 1], [], []>} : vector<8x48xf32>, vector<48x8xf32>, vector<8x8xf32> -> vector<8x8xf32>
    %16 = arith.addf %9, %15 : vector<8x8xf32>
    %c0_17 = arith.constant 0 : index
    %c0_18 = arith.constant 0 : index
    %17 = vector.load %arg4[%c0_17, %c0_18] : memref<8x1xf32, #tpu.memory_space<vmem>>, vector<8x1xf32>
    %18 = vector.broadcast %17 : vector<8x1xf32> to vector<8x8xf32>
    %19 = arith.addf %16, %18 : vector<8x8xf32>
    %c0_19 = arith.constant 0 : index
    %c0_20 = arith.constant 0 : index
    %c0_21 = arith.constant 0 : index
    %20 = vector.load %arg5[%c0_19, %c0_20, %c0_21] : memref<1x8x8xf32, #tpu.memory_space<vmem>>, vector<1x8x8xf32>
    %21 = vector.shape_cast %20 : vector<1x8x8xf32> to vector<8x8xf32>
    %22 = vector.shape_cast %19 : vector<8x8xf32> to vector<1x8x8xf32>
    tpu.vector_store %arg5[%c0_19, %c0_20, %c0_21], %22 {strides = array<i32>} : memref<1x8x8xf32, #tpu.memory_space<vmem>>, vector<1x8x8xf32>,
    return
  }
  func.func @transform_0(%arg0: i32) -> (i32, i32, i32) {
    %c0_i32 = arith.constant 0 : i32
    %c0_i32_0 = arith.constant 0 : i32
    %c0_i32_1 = arith.constant 0 : i32
    return %arg0, %c0_i32, %c0_i32_0 : i32, i32, i32
  }
  func.func @transform_1(%arg0: i32) -> (i32, i32, i32) {
    %c0_i32 = arith.constant 0 : i32
    %c0_i32_0 = arith.constant 0 : i32
    %c0_i32_1 = arith.constant 0 : i32
    %c0_i32_2 = arith.constant 0 : i32
    return %c0_i32, %c0_i32_0, %c0_i32_1 : i32, i32, i32
  }
  func.func @transform_2(%arg0: i32) -> (i32, i32, i32) {
    %c0_i32 = arith.constant 0 : i32
    %c0_i32_0 = arith.constant 0 : i32
    %c0_i32_1 = arith.constant 0 : i32
    %c0_i32_2 = arith.constant 0 : i32
    return %c0_i32, %c0_i32_0, %c0_i32_1 : i32, i32, i32
  }
  func.func @transform_3(%arg0: i32) -> (i32, i32) {
    %c0_i32 = arith.constant 0 : i32
    %c0_i32_0 = arith.constant 0 : i32
    %c0_i32_1 = arith.constant 0 : i32
    return %c0_i32, %c0_i32_0 : i32, i32
  }
  func.func @transform_4(%arg0: i32) -> (i32, i32, i32) {
    %c0_i32 = arith.constant 0 : i32
    %c0_i32_0 = arith.constant 0 : i32
    %c0_i32_1 = arith.constant 0 : i32
    return %arg0, %c0_i32, %c0_i32_0 : i32, i32, i32
  }
}

</mosaic_0001>

<llo_original>
// kernel: tpu_custom_call.1
$region0: #{tpu_custom_call.1}
  #allocation0 [shape = 'u32[]', space=smem, size = 0x4, offset = 0x4, fixed_abs, tag = 'smem constant byte address 0x4 - core index']
  #allocation1 [shape = 'u32[144,128]{1,0:T(1,128)}', space=vmem, size = 0x12000, scoped, tag = 'internal scratch']
  %s0 = inlined_call_operand.vmem [shape: f32[2,48,16], index: 0, kind: input, shape index: {}]
  %s1 = inlined_call_operand.vmem [shape: f32[2,16,8], index: 1, kind: input, shape index: {}]
  %s2 = inlined_call_operand.vmem [shape: f32[2,8,48], index: 2, kind: input, shape index: {}]
  %s3 = inlined_call_operand.vmem [shape: f32[8,1], index: 3, kind: input, shape index: {}]
  %s4 = inlined_call_operand.hbm [shape: f32[2,8,8], index: 4, kind: output, shape index: {}]
  %s5 = sld [smem:[#allocation0]]
  $region49: #{tpu_custom_call.1} parent=0
    _
  %s7 = ssub.s32 1, %s5
  %s8 = scalar_select 0, %s7, %s5
  $region1: #{tpu_custom_call.1} parent=0
    #allocation2 [shape = 'u8[8192]{0}', space=vmem, size = 0x2000, scoped, tag = 'output window, operand 0']
    #allocation3 [shape = 's32[2]{0}', space=sflag, size = 0x8, scoped, tag = 'scoped memory for tpu_custom_call.1']
    %9 = vsyncpa [#allocation3], 0
    %s10 = scalar_lea.sflag [#allocation3], 1
    %11 = vsyncpa %s10, 0
    loop: start=0, step=1, limit=4
    $region2: #{tpu_custom_call.1} parent=1 // loop_pre_header
      _
    $region3: #{tpu_custom_call.1} parent=1 // loop_header
      %s13 = sphi 0, %s17
      %p14 = scmp.ge.s32.totalorder %s13, 4
      %s23 = sphi 0, %s25
      %s26 = sphi 0, %s23
      %s27 = sphi 0, %s26
      %s43 = sphi 0, %s27
      %s47 = sphi 0, %s47
      %s49 = sphi 0, %s47
      %s50 = sphi 0, %s49
      %s64 = sphi 0, %s50
      %s68 = sphi 0, %s68
      %s70 = sphi 0, %s68
      %s71 = sphi 0, %s70
      %s85 = sphi 0, %s71
      %s89 = sphi 0, %s89
      %s91 = sphi 0, %s89
      %s92 = sphi 0, %s91
      %s106 = sphi 0, %s92
      %s112 = sphi 0, %s114
      %s115 = sphi 0, %s112
      %s116 = sphi 0, %s115
      %s132 = sphi 0, %s116
    $region4: #{tpu_custom_call.1} parent=1 // loop_header_branch
      %16 = sbr.rel (%p14) target = $region8
    $region5: #{tpu_custom_call.1} parent=1 // loop_body
      %s18 = ssub.s32 %s13, 1
      %s19 = ssub.s32 %s13, 2
      %s20 = sadd.s32 %s13, 1
      %s21 = ssub.s32 %s13, %s20
      %p22 = scmp.eq.s32.totalorder %s21, 0
      %s24 = sadd.s32 %s23, 1
      %s25 = scalar_select %p22, %s23, %s24
      %p28 = pneg %p22
      %p29 = scmp.eq.s32.totalorder %s13, 1
      %p30 = por %p28, %p29
      %p31 = scmp.ne.s32.totalorder %s23, %s26
      %p32 = scmp.eq.s32.totalorder %s13, 0
      %p33 = por %p31, %p32
      %p34 = scmp.ne.s32.totalorder %s23, %s26
      %p35 = scmp.eq.s32.totalorder %s18, 1
      %p36 = por %p34, %p35
      %p37 = scmp.ne.s32.totalorder %s26, %s27
      %p38 = scmp.eq.s32.totalorder %s18, 0
      %p39 = por %p37, %p38
      %p40 = scmp.ne.s32.totalorder %s26, %s27
      %p41 = scmp.eq.s32.totalorder %s19, 1
      %p42 = por %p40, %p41
      %p44 = scmp.ne.s32.totalorder %s27, %s43
      %p45 = scmp.eq.s32.totalorder %s19, 0
      %p46 = por %p44, %p45
      %s48 = sadd.s32 %s47, 1
      %p51 = scmp.eq.s32.totalorder %s13, 1
      %p52 = scmp.ne.s32.totalorder %s47, %s49
      %p53 = scmp.eq.s32.totalorder %s13, 0
      %p54 = por %p52, %p53
      %p55 = scmp.ne.s32.totalorder %s47, %s49
      %p56 = scmp.eq.s32.totalorder %s18, 1
      %p57 = por %p55, %p56
      %p58 = scmp.ne.s32.totalorder %s49, %s50
      %p59 = scmp.eq.s32.totalorder %s18, 0
      %p60 = por %p58, %p59
      %p61 = scmp.ne.s32.totalorder %s49, %s50
      %p62 = scmp.eq.s32.totalorder %s19, 1
      %p63 = por %p61, %p62
      %p65 = scmp.ne.s32.totalorder %s50, %s64
      %p66 = scmp.eq.s32.totalorder %s19, 0
      %p67 = por %p65, %p66
      %s69 = sadd.s32 %s68, 1
      %p72 = scmp.eq.s32.totalorder %s13, 1
      %p73 = scmp.ne.s32.totalorder %s68, %s70
      %p74 = scmp.eq.s32.totalorder %s13, 0
      %p75 = por %p73, %p74
      %p76 = scmp.ne.s32.totalorder %s68, %s70
      %p77 = scmp.eq.s32.totalorder %s18, 1
      %p78 = por %p76, %p77
      %p79 = scmp.ne.s32.totalorder %s70, %s71
      %p80 = scmp.eq.s32.totalorder %s18, 0
      %p81 = por %p79, %p80
      %p82 = scmp.ne.s32.totalorder %s70, %s71
      %p83 = scmp.eq.s32.totalorder %s19, 1
      %p84 = por %p82, %p83
      %p86 = scmp.ne.s32.totalorder %s71, %s85
      %p87 = scmp.eq.s32.totalorder %s19, 0
      %p88 = por %p86, %p87
      %s90 = sadd.s32 %s89, 1
      %p93 = scmp.eq.s32.totalorder %s13, 1
      %p94 = scmp.ne.s32.totalorder %s89, %s91
      %p95 = scmp.eq.s32.totalorder %s13, 0
      %p96 = por %p94, %p95
      %p97 = scmp.ne.s32.totalorder %s89, %s91
      %p98 = scmp.eq.s32.totalorder %s18, 1
      %p99 = por %p97, %p98
      %p100 = scmp.ne.s32.totalorder %s91, %s92
      %p101 = scmp.eq.s32.totalorder %s18, 0
      %p102 = por %p100, %p101
      %p103 = scmp.ne.s32.totalorder %s91, %s92
      %p104 = scmp.eq.s32.totalorder %s19, 1
      %p105 = por %p103, %p104
      %p107 = scmp.ne.s32.totalorder %s92, %s106
      %p108 = scmp.eq.s32.totalorder %s19, 0
      %p109 = por %p107, %p108
      %s110 = ssub.s32 %s13, %s20
      %p111 = scmp.eq.s32.totalorder %s110, 0
      %s113 = sadd.s32 %s112, 1
      %s114 = scalar_select %p111, %s112, %s113
      %p117 = pneg %p111
      %p118 = scmp.eq.s32.totalorder %s13, 1
      %p119 = por %p117, %p118
      %p120 = scmp.ne.s32.totalorder %s112, %s115
      %p121 = scmp.eq.s32.totalorder %s13, 0
      %p122 = por %p120, %p121
      %p123 = scmp.ne.s32.totalorder %s112, %s115
      %p124 = scmp.eq.s32.totalorder %s18, 1
      %p125 = por %p123, %p124
      %p126 = scmp.ne.s32.totalorder %s115, %s116
      %p127 = scmp.eq.s32.totalorder %s18, 0
      %p128 = por %p126, %p127
      %p129 = scmp.ne.s32.totalorder %s115, %s116
      %p130 = scmp.eq.s32.totalorder %s19, 1
      %p131 = por %p129, %p130
      %p133 = scmp.ne.s32.totalorder %s116, %s132
      %p134 = scmp.eq.s32.totalorder %s19, 0
      %p135 = por %p133, %p134
      %p136 = scmp.le.s32.totalorder 1, %s13
      %p137 = scmp.lt.s32.totalorder %s13, 3
      %p138 = pnand %p136, %p137
      %p139 = pneg %p138
      // Predicated region
      $region9: #{tpu_custom_call.1} parent=5 // pred_check
        _
      $region10: #{tpu_custom_call.1} parent=5 // pred_check_branch
        %141 = sbr.rel (%p138) target = $region12
      $region11: #{tpu_custom_call.1} parent=5 // pred_region
        %s142 = ssub.s32 %s13, 1
        // Predicated region
        $region13: #{tpu_custom_call.1} parent=11 // pred_check
          %p143 = pneg %p60
        $region14: #{tpu_custom_call.1} parent=11 // pred_check_branch
          %145 = sbr.rel (%p143) target = $region16
        $region15: #{tpu_custom_call.1} parent=11 // pred_region
          _
        $region16: #{tpu_custom_call.1} parent=11 // pred_fallthru
          _
        // Predicated region
        $region17: #{tpu_custom_call.1} parent=11 // pred_check
          %p146 = pneg %p81
        $region18: #{tpu_custom_call.1} parent=11 // pred_check_branch
          %148 = sbr.rel (%p146) target = $region20
        $region19: #{tpu_custom_call.1} parent=11 // pred_region
          _
        $region20: #{tpu_custom_call.1} parent=11 // pred_fallthru
          _
        // Predicated region
        $region21: #{tpu_custom_call.1} parent=11 // pred_check
          %p149 = pneg %p102
        $region22: #{tpu_custom_call.1} parent=11 // pred_check_branch
          %151 = sbr.rel (%p149) target = $region24
        $region23: #{tpu_custom_call.1} parent=11 // pred_region
          _
        $region24: #{tpu_custom_call.1} parent=11 // pred_fallthru
          _
      $region12: #{tpu_custom_call.1} parent=5 // pred_fallthru
        _
      %p152 = scmp.lt.s32.totalorder %s13, 2
      // Predicated region
      $region25: #{tpu_custom_call.1} parent=5 // pred_check
        %p153 = pneg %p152
      $region26: #{tpu_custom_call.1} parent=5 // pred_check_branch
        %155 = sbr.rel (%p153) target = $region28
      $region27: #{tpu_custom_call.1} parent=5 // pred_region
        // Predicated region
        $region29: #{tpu_custom_call.1} parent=27 // pred_check
          %p156 = pneg %p33
        $region30: #{tpu_custom_call.1} parent=27 // pred_check_branch
          %158 = sbr.rel (%p156) target = $region32
        $region31: #{tpu_custom_call.1} parent=27 // pred_region
          %p159 = scmp.lt.s32.totalorder %s13, 1
          %s160 = scalar_select %p159, %s13, 1
          %s161 = smul.addr %s160, 6
          %s162 = smul.addr %s161, 8
          %s163 = scalar_lea.vmem %s0, %s162
        $region32: #{tpu_custom_call.1} parent=27 // pred_fallthru
          _
      $region28: #{tpu_custom_call.1} parent=5 // pred_fallthru
        _
      %p164 = scmp.le.s32.totalorder 1, %s13
      %p165 = scmp.lt.s32.totalorder %s13, 3
      %p166 = pnand %p164, %p165
      %p167 = pneg %p166
      // Predicated region
      $region33: #{tpu_custom_call.1} parent=5 // pred_check
        _
      $region34: #{tpu_custom_call.1} parent=5 // pred_check_branch
        %169 = sbr.rel (%p166) target = $region36
      $region35: #{tpu_custom_call.1} parent=5 // pred_region
        %s170 = ssub.s32 %s13, 1
        %p171 = scmp.lt.s32.totalorder %s18, 1
        %s172 = scalar_select %p171, %s18, 1
        %s173 = smul.addr %s172, 6
        %s174 = smul.addr %s173, 8
        %s175 = scalar_lea.vmem %s0, %s174
        %p176 = pneg %p39
        %p177 = pneg %p36
        %p178 = pneg %p60
        %p179 = pneg %p57
        %p180 = pneg %p81
        %p181 = pneg %p78
        %p182 = pneg %p102
        %p183 = pneg %p99
        %p184 = pneg %p128
        %p185 = pneg %p125
        %s186 = sand.u32 %s115, 1
        %s187 = scalar_lea.sflag [#allocation3], %s186
        %s188 = sand.u32 %s115, 1
        %s189 = smul.addr %s188, 8
        %s190 = scalar_lea.vmem [#allocation2], %s189
        %p191 = scmp.lt.s32.totalorder %s18, 1
        %s192 = scalar_select %p191, %s18, 1
        %s193 = smul.addr %s192, 6
        %s194 = smul.addr %s193, 8
        %s195 = scalar_lea.vmem %s0, %s194
        %v196 = vld [vmem:[%s195] sm:$0xff]
        %v197 = vld [vmem:[%s195 + $0x8] sm:$0xff]
        %v198 = vld [vmem:[%s195 + $0x10] sm:$0xff]
        %v199 = vld [vmem:[%s195 + $0x18] sm:$0xff]
        %v200 = vld [vmem:[%s195 + $0x20] sm:$0xff]
        %v201 = vld [vmem:[%s195 + $0x28] sm:$0xff]
        %v202 = vld [vmem:[%s1] sm:$0xff]
        %v203 = vld [vmem:[%s1 + $0x8] sm:$0xff]
        %vm204 = vcmask 130048
        %v206 = vsel %vm204, %v196, 0
        %v209 = vsel %vm204, %v197, 0
        %v212 = vsel %vm204, %v198, 0
        %v215 = vsel %vm204, %v199, 0
        %v218 = vsel %vm204, %v200, 0
        %v221 = vsel %vm204, %v201, 0
        %223 = vmatprep.subr.mxu0 0.0
        %224 = vmatpush1.msra.mxu0 0.0
        %225 = vmatprep.subr.mxu0 0.0
        %226 = vmatpush1.msra.mxu0 0.0
        %227 = vmatprep.subr.mxu0 0.0
        %228 = vmatpush1.msra.mxu0 0.0
        %229 = vmatprep.subr.mxu0 0.0
        %230 = vmatpush1.msra.mxu0 0.0
        %231 = vmatprep.subr.mxu0 0.0
        %232 = vmatpush1.msra.mxu0 0.0
        %233 = vmatprep.subr.mxu0 0.0
        %234 = vmatpush1.msra.mxu0 0.0
        %235 = vmatprep.subr.mxu0 0.0
        %236 = vmatpush1.msra.mxu0 0.0
        %237 = vmatprep.subr.mxu0 0.0
        %238 = vmatpush1.msra.mxu0 0.0
        %239 = vmatprep.subr.mxu0 0.0
        %240 = vmatpush1.msra.mxu0 0.0
        %241 = vmatprep.subr.mxu0 0.0
        %242 = vmatpush1.msra.mxu0 0.0
        %243 = vmatprep.subr.mxu0 0.0
        %244 = vmatpush1.msra.mxu0 0.0
        %245 = vmatprep.subr.mxu0 0.0
        %246 = vmatpush1.msra.mxu0 0.0
        %247 = vmatprep.subr.mxu0 0.0
        %248 = vmatpush1.msra.mxu0 0.0
        %249 = vmatprep.subr.mxu0 0.0
        %250 = vmatpush1.msra.mxu0 0.0
        %251 = vmatprep.subr.mxu0 0.0
        %252 = vmatpush1.msra.mxu0 %v203
        %253 = vmatprep.subr.mxu0 0.0
        %254 = vmatpush1.msra.mxu0 %v202
        %255 = vmatprep.subr.mxu0 0.0
        %256 = vmatpush2.msra.mxu0 0.0
        %257 = vmatprep.subr.mxu0 0.0
        %258 = vmatpush2.msra.mxu0 0.0
        %259 = vmatprep.subr.mxu0 0.0
        %260 = vmatpush2.msra.mxu0 0.0
        %261 = vmatprep.subr.mxu0 0.0
        %262 = vmatpush2.msra.mxu0 0.0
        %263 = vmatprep.subr.mxu0 0.0
        %264 = vmatpush2.msra.mxu0 0.0
        %265 = vmatprep.subr.mxu0 0.0
        %266 = vmatpush2.msra.mxu0 0.0
        %267 = vmatprep.subr.mxu0 0.0
        %268 = vmatpush2.msra.mxu0 0.0
        %269 = vmatprep.subr.mxu0 0.0
        %270 = vmatpush2.msra.mxu0 0.0
        %271 = vmatprep.subr.mxu0 0.0
        %272 = vmatpush2.msra.mxu0 0.0
        %273 = vmatprep.subr.mxu0 0.0
        %274 = vmatpush2.msra.mxu0 0.0
        %275 = vmatprep.subr.mxu0 0.0
        %276 = vmatpush2.msra.mxu0 0.0
        %277 = vmatprep.subr.mxu0 0.0
        %278 = vmatpush2.msra.mxu0 0.0
        %279 = vmatprep.subr.mxu0 0.0
        %280 = vmatpush2.msra.mxu0 0.0
        %281 = vmatprep.subr.mxu0 0.0
        %282 = vmatpush2.msra.mxu0 0.0
        %283 = vmatprep.subr.mxu0 0.0
        %284 = vmatpush2.msra.mxu0 0.0
        %285 = vmatprep.subr.mxu0 0.0
        %286 = vmatpush2.msra.mxu0 0.0
        %287 = vmatprep.mubr.f32.mxu0 0.0
        %288 = vmatmul.mubr.f32.gmra.mxu0 %v206
        %v289 = vpop.f32.mrf.mxu0
        %v290 = vadd.f32 0.0, %v289
        %v291 = vpop.f32.mrf.mxu0
        %292 = vmatprep.mubr.f32.mxu0 0.0
        %293 = vmatmul.mubr.f32.gmra.mxu0 %v209
        %v294 = vpop.f32.mrf.mxu0
        %v295 = vadd.f32 0.0, %v294
        %v296 = vpop.f32.mrf.mxu0
        %297 = vmatprep.mubr.f32.mxu0 0.0
        %298 = vmatmul.mubr.f32.gmra.mxu0 %v212
        %v299 = vpop.f32.mrf.mxu0
        %v300 = vadd.f32 0.0, %v299
        %v301 = vpop.f32.mrf.mxu0
        %302 = vmatprep.mubr.f32.mxu0 0.0
        %303 = vmatmul.mubr.f32.gmra.mxu0 %v215
        %v304 = vpop.f32.mrf.mxu0
        %v305 = vadd.f32 0.0, %v304
        %v306 = vpop.f32.mrf.mxu0
        %307 = vmatprep.mubr.f32.mxu0 0.0
        %308 = vmatmul.mubr.f32.gmra.mxu0 %v218
        %v309 = vpop.f32.mrf.mxu0
        %v310 = vadd.f32 0.0, %v309
        %v311 = vpop.f32.mrf.mxu0
        %312 = vmatprep.mubr.f32.mxu0 0.0
        %313 = vmatmul.mubr.f32.gmra.mxu0 %v221
        %v314 = vpop.f32.mrf.mxu0
        %v315 = vadd.f32 0.0, %v314
        %v316 = vpop.f32.mrf.mxu0
        %317 = vdwg.mxu0
        %v318 = vld [vmem:[%s2] sm:$0xff]
        %s319 = scalar_lea.vmem %s1, 16
        %v320 = vld [vmem:[%s319] sm:$0xff]
        %v321 = vld [vmem:[%s319 + $0x8] sm:$0xff]
        %322 = vmatprep.subr.mxu0 0.0
        %323 = vmatpush1.msra.mxu0 0.0
        %324 = vmatprep.subr.mxu0 0.0
        %325 = vmatpush1.msra.mxu0 0.0
        %326 = vmatprep.subr.mxu0 0.0
        %327 = vmatpush1.msra.mxu0 0.0
        %328 = vmatprep.subr.mxu0 0.0
        %329 = vmatpush1.msra.mxu0 0.0
        %330 = vmatprep.subr.mxu0 0.0
        %331 = vmatpush1.msra.mxu0 0.0
        %332 = vmatprep.subr.mxu0 0.0
        %333 = vmatpush1.msra.mxu0 0.0
        %334 = vmatprep.subr.mxu0 0.0
        %335 = vmatpush1.msra.mxu0 0.0
        %336 = vmatprep.subr.mxu0 0.0
        %337 = vmatpush1.msra.mxu0 0.0
        %338 = vmatprep.subr.mxu0 0.0
        %339 = vmatpush1.msra.mxu0 0.0
        %340 = vmatprep.subr.mxu0 0.0
        %341 = vmatpush1.msra.mxu0 0.0
        %342 = vmatprep.subr.mxu0 0.0
        %343 = vmatpush1.msra.mxu0 0.0
        %344 = vmatprep.subr.mxu0 0.0
        %345 = vmatpush1.msra.mxu0 0.0
        %346 = vmatprep.subr.mxu0 0.0
        %347 = vmatpush1.msra.mxu0 0.0
        %348 = vmatprep.subr.mxu0 0.0
        %349 = vmatpush1.msra.mxu0 0.0
        %350 = vmatprep.subr.mxu0 0.0
        %351 = vmatpush1.msra.mxu0 %v321
        %352 = vmatprep.subr.mxu0 0.0
        %353 = vmatpush1.msra.mxu0 %v320
        %354 = vmatprep.subr.mxu0 0.0
        %355 = vmatpush2.msra.mxu0 0.0
        %356 = vmatprep.subr.mxu0 0.0
        %357 = vmatpush2.msra.mxu0 0.0
        %358 = vmatprep.subr.mxu0 0.0
        %359 = vmatpush2.msra.mxu0 0.0
        %360 = vmatprep.subr.mxu0 0.0
        %361 = vmatpush2.msra.mxu0 0.0
        %362 = vmatprep.subr.mxu0 0.0
        %363 = vmatpush2.msra.mxu0 0.0
        %364 = vmatprep.subr.mxu0 0.0
        %365 = vmatpush2.msra.mxu0 0.0
        %366 = vmatprep.subr.mxu0 0.0
        %367 = vmatpush2.msra.mxu0 0.0
        %368 = vmatprep.subr.mxu0 0.0
        %369 = vmatpush2.msra.mxu0 0.0
        %370 = vmatprep.subr.mxu0 0.0
        %371 = vmatpush2.msra.mxu0 0.0
        %372 = vmatprep.subr.mxu0 0.0
        %373 = vmatpush2.msra.mxu0 0.0
        %374 = vmatprep.subr.mxu0 0.0
        %375 = vmatpush2.msra.mxu0 0.0
        %376 = vmatprep.subr.mxu0 0.0
        %377 = vmatpush2.msra.mxu0 0.0
        %378 = vmatprep.subr.mxu0 0.0
        %379 = vmatpush2.msra.mxu0 0.0
        %380 = vmatprep.subr.mxu0 0.0
        %381 = vmatpush2.msra.mxu0 0.0
        %382 = vmatprep.subr.mxu0 0.0
        %383 = vmatpush2.msra.mxu0 0.0
        %384 = vmatprep.subr.mxu0 0.0
        %385 = vmatpush2.msra.mxu0 0.0
        %386 = vmatprep.mubr.f32.mxu0 0.0
        %387 = vmatmul.mubr.f32.gmra.mxu0 %v206
        %v388 = vpop.f32.mrf.mxu0
        %v389 = vadd.f32 0.0, %v388
        %v390 = vpop.f32.mrf.mxu0
        %391 = vmatprep.mubr.f32.mxu0 0.0
        %392 = vmatmul.mubr.f32.gmra.mxu0 %v209
        %v393 = vpop.f32.mrf.mxu0
        %v394 = vadd.f32 0.0, %v393
        %v395 = vpop.f32.mrf.mxu0
        %396 = vmatprep.mubr.f32.mxu0 0.0
        %397 = vmatmul.mubr.f32.gmra.mxu0 %v212
        %v398 = vpop.f32.mrf.mxu0
        %v399 = vadd.f32 0.0, %v398
        %v400 = vpop.f32.mrf.mxu0
        %401 = vmatprep.mubr.f32.mxu0 0.0
        %402 = vmatmul.mubr.f32.gmra.mxu0 %v215
        %v403 = vpop.f32.mrf.mxu0
        %v404 = vadd.f32 0.0, %v403
        %v405 = vpop.f32.mrf.mxu0
        %406 = vmatprep.mubr.f32.mxu0 0.0
        %407 = vmatmul.mubr.f32.gmra.mxu0 %v218
        %v408 = vpop.f32.mrf.mxu0
        %v409 = vadd.f32 0.0, %v408
        %v410 = vpop.f32.mrf.mxu0
        %411 = vmatprep.mubr.f32.mxu0 0.0
        %412 = vmatmul.mubr.f32.gmra.mxu0 %v221
        %v413 = vpop.f32.mrf.mxu0
        %v414 = vadd.f32 0.0, %v413
        %v415 = vpop.f32.mrf.mxu0
        %416 = vdwg.mxu0
        %s417 = scalar_lea.vmem %s2, 8
        %v418 = vld [vmem:[%s417] sm:$0xff]
        %vm419 = vcmask 392192
        %v421 = vsel %vm419, %v418, 0
        %423 = vmatprep.subr.mxu0 0.0
        %424 = vmatpush1.msra.mxu0 0.0
        %425 = vmatprep.subr.mxu0 0.0
        %426 = vmatpush1.msra.mxu0 0.0
        %427 = vmatprep.subr.mxu0 0.0
        %428 = vmatpush1.msra.mxu0 0.0
        %429 = vmatprep.subr.mxu0 0.0
        %430 = vmatpush1.msra.mxu0 0.0
        %431 = vmatprep.subr.mxu0 0.0
        %432 = vmatpush1.msra.mxu0 0.0
        %433 = vmatprep.subr.mxu0 0.0
        %434 = vmatpush1.msra.mxu0 0.0
        %435 = vmatprep.subr.mxu0 0.0
        %436 = vmatpush1.msra.mxu0 0.0
        %437 = vmatprep.subr.mxu0 0.0
        %438 = vmatpush1.msra.mxu0 0.0
        %439 = vmatprep.subr.mxu0 0.0
        %440 = vmatpush1.msra.mxu0 0.0
        %441 = vmatprep.subr.mxu0 0.0
        %442 = vmatpush1.msra.mxu0 0.0
        %443 = vmatprep.subr.mxu0 0.0
        %444 = vmatpush1.msra.mxu0 %v414
        %445 = vmatprep.subr.mxu0 0.0
        %446 = vmatpush1.msra.mxu0 %v409
        %447 = vmatprep.subr.mxu0 0.0
        %448 = vmatpush1.msra.mxu0 %v404
        %449 = vmatprep.subr.mxu0 0.0
        %450 = vmatpush1.msra.mxu0 %v399
        %451 = vmatprep.subr.mxu0 0.0
        %452 = vmatpush1.msra.mxu0 %v394
        %453 = vmatprep.subr.mxu0 0.0
        %454 = vmatpush1.msra.mxu0 %v389
        %455 = vmatprep.subr.mxu0 0.0
        %456 = vmatpush2.msra.mxu0 0.0
        %457 = vmatprep.subr.mxu0 0.0
        %458 = vmatpush2.msra.mxu0 0.0
        %459 = vmatprep.subr.mxu0 0.0
        %460 = vmatpush2.msra.mxu0 0.0
        %461 = vmatprep.subr.mxu0 0.0
        %462 = vmatpush2.msra.mxu0 0.0
        %463 = vmatprep.subr.mxu0 0.0
        %464 = vmatpush2.msra.mxu0 0.0
        %465 = vmatprep.subr.mxu0 0.0
        %466 = vmatpush2.msra.mxu0 0.0
        %467 = vmatprep.subr.mxu0 0.0
        %468 = vmatpush2.msra.mxu0 0.0
        %469 = vmatprep.subr.mxu0 0.0
        %470 = vmatpush2.msra.mxu0 0.0
        %471 = vmatprep.subr.mxu0 0.0
        %472 = vmatpush2.msra.mxu0 0.0
        %473 = vmatprep.subr.mxu0 0.0
        %474 = vmatpush2.msra.mxu0 0.0
        %475 = vmatprep.subr.mxu0 0.0
        %476 = vmatpush2.msra.mxu0 0.0
        %477 = vmatprep.subr.mxu0 0.0
        %478 = vmatpush2.msra.mxu0 0.0
        %479 = vmatprep.subr.mxu0 0.0
        %480 = vmatpush2.msra.mxu0 0.0
        %481 = vmatprep.subr.mxu0 0.0
        %482 = vmatpush2.msra.mxu0 0.0
        %483 = vmatprep.subr.mxu0 0.0
        %484 = vmatpush2.msra.mxu0 0.0
        %485 = vmatprep.subr.mxu0 0.0
        %486 = vmatpush2.msra.mxu0 0.0
        %487 = vmatprep.mubr.f32.mxu0 0.0
        %488 = vmatmul.mubr.f32.gmra.mxu0 %v421
        %v489 = vpop.f32.mrf.mxu0
        %v490 = vadd.f32 0.0, %v489
        %v491 = vpop.f32.mrf.mxu0
        %492 = vdwg.mxu0
        %v494 = vsel %vm419, %v318, 0
        %496 = vmatprep.subr.mxu0 0.0
        %497 = vmatpush1.msra.mxu0 0.0
        %498 = vmatprep.subr.mxu0 0.0
        %499 = vmatpush1.msra.mxu0 0.0
        %500 = vmatprep.subr.mxu0 0.0
        %501 = vmatpush1.msra.mxu0 0.0
        %502 = vmatprep.subr.mxu0 0.0
        %503 = vmatpush1.msra.mxu0 0.0
        %504 = vmatprep.subr.mxu0 0.0
        %505 = vmatpush1.msra.mxu0 0.0
        %506 = vmatprep.subr.mxu0 0.0
        %507 = vmatpush1.msra.mxu0 0.0
        %508 = vmatprep.subr.mxu0 0.0
        %509 = vmatpush1.msra.mxu0 0.0
        %510 = vmatprep.subr.mxu0 0.0
        %511 = vmatpush1.msra.mxu0 0.0
        %512 = vmatprep.subr.mxu0 0.0
        %513 = vmatpush1.msra.mxu0 0.0
        %514 = vmatprep.subr.mxu0 0.0
        %515 = vmatpush1.msra.mxu0 0.0
        %516 = vmatprep.subr.mxu0 0.0
        %517 = vmatpush1.msra.mxu0 %v315
        %518 = vmatprep.subr.mxu0 0.0
        %519 = vmatpush1.msra.mxu0 %v310
        %520 = vmatprep.subr.mxu0 0.0
        %521 = vmatpush1.msra.mxu0 %v305
        %522 = vmatprep.subr.mxu0 0.0
        %523 = vmatpush1.msra.mxu0 %v300
        %524 = vmatprep.subr.mxu0 0.0
        %525 = vmatpush1.msra.mxu0 %v295
        %526 = vmatprep.subr.mxu0 0.0
        %527 = vmatpush1.msra.mxu0 %v290
        %528 = vmatprep.subr.mxu0 0.0
        %529 = vmatpush2.msra.mxu0 0.0
        %530 = vmatprep.subr.mxu0 0.0
        %531 = vmatpush2.msra.mxu0 0.0
        %532 = vmatprep.subr.mxu0 0.0
        %533 = vmatpush2.msra.mxu0 0.0
        %534 = vmatprep.subr.mxu0 0.0
        %535 = vmatpush2.msra.mxu0 0.0
        %536 = vmatprep.subr.mxu0 0.0
        %537 = vmatpush2.msra.mxu0 0.0
        %538 = vmatprep.subr.mxu0 0.0
        %539 = vmatpush2.msra.mxu0 0.0
        %540 = vmatprep.subr.mxu0 0.0
        %541 = vmatpush2.msra.mxu0 0.0
        %542 = vmatprep.subr.mxu0 0.0
        %543 = vmatpush2.msra.mxu0 0.0
        %544 = vmatprep.subr.mxu0 0.0
        %545 = vmatpush2.msra.mxu0 0.0
        %546 = vmatprep.subr.mxu0 0.0
        %547 = vmatpush2.msra.mxu0 0.0
        %548 = vmatprep.subr.mxu0 0.0
        %549 = vmatpush2.msra.mxu0 0.0
        %550 = vmatprep.subr.mxu0 0.0
        %551 = vmatpush2.msra.mxu0 0.0
        %552 = vmatprep.subr.mxu0 0.0
        %553 = vmatpush2.msra.mxu0 0.0
        %554 = vmatprep.subr.mxu0 0.0
        %555 = vmatpush2.msra.mxu0 0.0
        %556 = vmatprep.subr.mxu0 0.0
        %557 = vmatpush2.msra.mxu0 0.0
        %558 = vmatprep.subr.mxu0 0.0
        %559 = vmatpush2.msra.mxu0 0.0
        %560 = vmatprep.mubr.f32.mxu0 0.0
        %561 = vmatmul.mubr.f32.gmra.mxu0 %v494
        %v562 = vpop.f32.mrf.mxu0
        %v563 = vadd.f32 %v490, %v562
        %v564 = vpop.f32.mrf.mxu0
        %565 = vdwg.mxu0
        %v566 = vld [vmem:[%s3] sm:$0xff]
        %568 = vset.pattern.permute.xlu0 0
        %569 = vperm.xlu0 %568, %v566
        %v570 = vpop.permute.xlu0 %569
        %v572 = vadd.f32 %v563, %v570
        %vm573 = vcmask 64512
        %574 = vst.msk [vmem:[%s190] sm:$0xff] %vm573, %v572
        %s575 = sand.u32 %s115, 1
        %s576 = scalar_lea.sflag [#allocation3], %s575
        %s577 = sand.u32 %s115, 1
        %s578 = smul.addr %s577, 8
        %s579 = scalar_lea.vmem [#allocation2], %s578
        // Predicated region
        $region37: #{tpu_custom_call.1} parent=35 // pred_check
          %p580 = pneg %p125
        $region38: #{tpu_custom_call.1} parent=35 // pred_check_branch
          %582 = sbr.rel (%p580) target = $region40
        $region39: #{tpu_custom_call.1} parent=35 // pred_region
          %s584 = ssub.s32 128, 128
          %585 = vsyncadd %s576, %s584
          %s586 = smul.addr %s18, 128
          %s587 = scalar_lea.hbm %s4, %s586
          %s589 = sshll.u32 %s579, 4
          %s590 = int_to_ptr.vmem [resolvable:$true] %s589
          %592 = dma.vmem_to_hbm [thread:$0]  %s590, 128, %s587, %s576
        $region40: #{tpu_custom_call.1} parent=35 // pred_fallthru
          _
      $region36: #{tpu_custom_call.1} parent=5 // pred_fallthru
        _
      %p593 = scmp.le.s32.totalorder 2, %s13
      // Predicated region
      $region41: #{tpu_custom_call.1} parent=5 // pred_check
        %p594 = pneg %p593
      $region42: #{tpu_custom_call.1} parent=5 // pred_check_branch
        %596 = sbr.rel (%p594) target = $region44
      $region43: #{tpu_custom_call.1} parent=5 // pred_region
        %s597 = ssub.s32 %s13, 2
        // Predicated region
        $region45: #{tpu_custom_call.1} parent=43 // pred_check
          %p598 = pneg %p131
        $region46: #{tpu_custom_call.1} parent=43 // pred_check_branch
          %600 = sbr.rel (%p598) target = $region48
        $region47: #{tpu_custom_call.1} parent=43 // pred_region
          %s601 = sand.u32 %s116, 1
          %s602 = scalar_lea.sflag [#allocation3], %s601
          %s603 = sand.u32 %s116, 1
          %s604 = smul.addr %s603, 8
          %s605 = scalar_lea.vmem [#allocation2], %s604
          %606 = dma.done %s602, 128
        $region48: #{tpu_custom_call.1} parent=43 // pred_fallthru
          _
      $region44: #{tpu_custom_call.1} parent=5 // pred_fallthru
        _
    $region6: #{tpu_custom_call.1} parent=1 // loop_footer
      %s17 = sadd.s32 1, %s13
    $region7: #{tpu_custom_call.1} parent=1 // loop_footer_branch
      %12 = sbr.rel target = $region3
    $region8: #{tpu_custom_call.1} parent=1 // loop_exit
      _
    %607 = vsyncpa [#allocation3], 1
    %s608 = scalar_lea.sflag [#allocation3], 1
    %609 = vsyncpa %s608, 1

</llo_original>
